<compile_context>
chip_gen: v7x
topology: tpu7x:2x2x1
jax: 0.10.0
libtpu: 0.0.40
codegen_flags: <defaults>
</compile_context>

<pallas_src>
import jax
import jax.numpy as jnp
from jax import lax
from jax.experimental import pallas as pl
from jax.experimental.pallas import tpu as pltpu

_SMEM_SPACE = pltpu.MemorySpace.SMEM


def _vmem_limit_bytes():
    """Per-generation scoped-VMEM budget (v7x has only 64 MiB physical)."""
    try:
        cap = int(pltpu.get_tpu_info().vmem_capacity_bytes)
        return min((cap * 3) // 4, 100 * 1024 * 1024)   # 48 MiB v7x, 96 MiB v5e/v6e
    except Exception:
        return 32 * 1024 * 1024

_VMEM_LIMIT = _vmem_limit_bytes()

# dot_general dims: contract the spatial axis of both operands -> (C, C)
_CONTRACT_LANE = (((1,), (1,)), ((), ()))      # (C, M) layout, spatial = lane dim
_CONTRACT_SUBLANE = (((0,), (0,)), ((), ()))   # (M, C) layout, spatial = sublane dim


def _pick_spatial_tile(c, m, itemsize, spatial_tile=None, target_bytes=2 << 20):
    """Spatial tile so that one feature block is ~2 MiB, lane aligned.

    Returns (tm, grid_m, ragged).  If the whole spatial extent fits in one
    tile, the block covers the full array (always layout-legal)."""
    if spatial_tile is not None:
        tm = max(128, (int(spatial_tile) // 128) * 128)
    else:
        tm = max(512, ((target_bytes // (max(int(c), 1) * int(itemsize))) // 128) * 128)
    if m <= tm:
        return m, 1, False
    grid_m = (m + tm - 1) // tm
    return tm, grid_m, (m % tm) != 0


def _spatial_mask(step, tm, tile_shape, spatial_axis, m):
    """valid[i] = (global spatial index < m) for the ragged last tile."""
    pos = step * tm + lax.broadcasted_iota(jnp.int32, tile_shape, spatial_axis)
    return pos < m


# --------------------- tiled gram kernel (style precompute) ---------------------

def _make_gram_kernel(c, m, tm, ragged, channels_last):
    contract = _CONTRACT_SUBLANE if channels_last else _CONTRACT_LANE
    spatial_axis = 0 if channels_last else 1
    tile_shape = (tm, c) if channels_last else (c, tm)

    def kernel(x_ref, g_ref):
        k = pl.program_id(0)

        @pl.when(k == 0)
        def _():
            g_ref[...] = jnp.zeros_like(g_ref)

        x = x_ref[...]
        if ragged:
            valid = _spatial_mask(k, tm, tile_shape, spatial_axis, m)
            x = jnp.where(valid, x, jnp.zeros_like(x))
        g_ref[...] += lax.dot_general(x, x, contract,
                                      preferred_element_type=jnp.float32)

    return kernel


def gram_matrix(x_flat, *, channels_last=False, spatial_tile=None):
    """X gram over channels.

    channels_last=False: x_flat is (C, M), returns X @ X^T (lane-dense tiles).
    channels_last=True : x_flat is (M, C), returns X^T @ X (MXU-native sublane
                         contraction, lane-dense (C, C) output for big C).
    Spatially tiled over M with a resident f32 accumulator; the ragged last
    tile is masked in-kernel (no padding pass in HBM)."""
    if channels_last:
        m, c = x_flat.shape
        block, idx_map = None, None
    else:
        c, m = x_flat.shape
    itemsize = jnp.dtype(x_flat.dtype).itemsize
    tm, grid_m, ragged = _pick_spatial_tile(c, m, itemsize, spatial_tile)
    if channels_last:
        block, idx_map = (tm, c), (lambda k: (k, 0))
    else:
        block, idx_map = (c, tm), (lambda k: (0, k))

    return pl.pallas_call(
        _make_gram_kernel(c, m, tm, ragged, channels_last),
        out_shape=jax.ShapeDtypeStruct((c, c), jnp.float32),
        grid=(grid_m,),
        in_specs=[pl.BlockSpec(block, idx_map)],
        out_specs=pl.BlockSpec((c, c), lambda k: (0, 0)),   # resident accumulator
        compiler_params=pltpu.CompilerParams(
            dimension_semantics=("arbitrary",),
            vmem_limit_bytes=_VMEM_LIMIT),
    )(x_flat)


# --------------------- streamed per-layer loss kernel ---------------------

def _make_layer_loss_kernel(c, m, tm, grid_m, ragged, channels_last,
                            has_content, content_numel):
    contract = _CONTRACT_SUBLANE if channels_last else _CONTRACT_LANE
    spatial_axis = 0 if channels_last else 1
    tile_shape = (tm, c) if channels_last else (c, tm)
    inv_c6 = 1.0 / float(c) ** 6
    inv_numel = (1.0 / float(content_numel)) if has_content else 0.0

    def kernel(*refs):
        ab_ref = refs[0]                       # SMEM (2,): [alpha, beta]
        x_ref = refs[1]                        # input feature tile
        gs_ref = refs[2]                       # precomputed style gram, resident
        idx = 3
        if has_content:
            cont_ref = refs[idx]; idx += 1     # content feature tile (same tiling)
        out_ref = refs[idx]                    # SMEM (1,) per-layer loss
        g_acc = refs[idx + 1]                  # VMEM (C, C) f32 gram accumulator
        csse = refs[idx + 2] if has_content else None   # SMEM (1,) content SSE

        k = pl.program_id(0)

        @pl.when(k == 0)
        def _():
            g_acc[...] = jnp.zeros_like(g_acc)
            if has_content:
                csse[0] = jnp.float32(0.0)

        x = x_ref[...]
        if ragged:
            valid = _spatial_mask(k, tm, tile_shape, spatial_axis, m)
            x = jnp.where(valid, x, jnp.zeros_like(x))

        # Input gram accumulation on the MXU (f32 accumulator).
        g_acc[...] += lax.dot_general(x, x, contract,
                                      preferred_element_type=jnp.float32)

        if has_content:
            d = x.astype(jnp.float32) - cont_ref[...].astype(jnp.float32)
            if ragged:
                d = jnp.where(valid, d, jnp.zeros_like(d))
            csse[0] += jnp.sum(d * d)

        # Epilogue: combine weighted terms once all spatial tiles are in.
        @pl.when(k == grid_m - 1)
        def _():
            alpha = ab_ref[0]
            beta = ab_ref[1]
            dg = g_acc[...] - gs_ref[...]
            # beta * MSE(Gx, Gs) / C^2 / C^2  ==  beta * SSE / C^6
            loss = beta * (jnp.sum(dg * dg) * jnp.float32(inv_c6))
            if has_content:
                loss = loss + alpha * (csse[0] * jnp.float32(inv_numel))
            out_ref[0] = loss

    return kernel


def layer_loss(ab, x_flat, style_gram, content_flat=None, *,
               channels_last=False, spatial_tile=None):
    """One streamed pallas_call computing a single layer's weighted loss term.

    x_flat / content_flat: (C, M) or (M, C) depending on channels_last.
    style_gram: (C, C) f32. ab: (2,) f32 [alpha, beta]. Returns scalar f32."""
    if channels_last:
        m, c = x_flat.shape
    else:
        c, m = x_flat.shape
    itemsize = jnp.dtype(x_flat.dtype).itemsize
    tm, grid_m, ragged = _pick_spatial_tile(c, m, itemsize, spatial_tile)
    has_content = content_flat is not None

    if channels_last:
        block, idx_map = (tm, c), (lambda k: (k, 0))
    else:
        block, idx_map = (c, tm), (lambda k: (0, k))

    in_specs = [pl.BlockSpec(memory_space=_SMEM_SPACE),          # alpha/beta
                pl.BlockSpec(block, idx_map),                    # input tiles
                pl.BlockSpec((c, c), lambda k: (0, 0))]          # style gram (resident)
    inputs = [ab, x_flat, style_gram]
    if has_content:
        in_specs.append(pl.BlockSpec(block, idx_map))            # content tiles
        inputs.append(content_flat)

    scratch = [pltpu.VMEM((c, c), jnp.float32)]
    if has_content:
        scratch.append(pltpu.SMEM((1,), jnp.float32))

    kernel = _make_layer_loss_kernel(
        c, m, tm, grid_m, ragged, channels_last, has_content,
        int(content_flat.size) if has_content else 0)

    out = pl.pallas_call(
        kernel,
        out_shape=jax.ShapeDtypeStruct((1,), jnp.float32),
        grid=(grid_m,),
        in_specs=in_specs,
        out_specs=pl.BlockSpec(memory_space=_SMEM_SPACE),
        scratch_shapes=scratch,
        compiler_params=pltpu.CompilerParams(
            dimension_semantics=("arbitrary",),
            vmem_limit_bytes=_VMEM_LIMIT),
    )(*inputs)
    return out[0]


# --------------------- module wrapper ---------------------

class StyleTransferLoss:
    """JAX/Pallas port of the PyTorch StyleTransferLoss module."""

    def __init__(self, alpha, beta, *, compute_dtype=None, spatial_tile=None,
                 channels_last_threshold=128):
        self.alpha = alpha
        self.beta = beta
        self.compute_dtype = compute_dtype          # e.g. jnp.bfloat16 (HBM-bound win)
        self.spatial_tile = spatial_tile             # None -> adaptive (~2 MiB blocks)
        self.channels_last_threshold = channels_last_threshold
        self._style_gram_cache = {}                  # id -> (style_dict, grams)

    # -- helpers -------------------------------------------------------------

    def _channels_last(self, c):
        return c >= self.channels_last_threshold

    def _flatten_one(self, v):
        """torch.flatten(filter, start_dim=1); channels-last for big C so the
        gram contraction is MXU-native (sublane) and the output lane-dense."""
        c = int(v.shape[0])
        flat = v.reshape(c, -1)
        if self.compute_dtype is not None:
            flat = flat.astype(self.compute_dtype)
        if self._channels_last(c):
            flat = flat.T                            # (M, C)
        return flat

    def gram_matrices(self, representation):
        grams = {}
        for name, feat in representation.items():
            c = int(feat.shape[0])
            grams[name] = gram_matrix(self._flatten_one(feat),
                                      channels_last=self._channels_last(c),
                                      spatial_tile=self.spatial_tile)
        return grams

    def _style_grams(self, style_representation):
        key = id(style_representation)
        hit = self._style_gram_cache.get(key)
        if hit is not None and hit[0] is style_representation:
            return hit[1]
        grams = self.gram_matrices(style_representation)
        # Keep a strong reference to the style dict so its id() cannot be
        # recycled and silently serve stale grams.
        self._style_gram_cache[key] = (style_representation, grams)
        return grams

    # -- forward -------------------------------------------------------------

    def forward(self, input_representation, content_representation,
                style_representation):
        ab = jnp.asarray([self.alpha, self.beta], dtype=jnp.float32)
        style_grams = self._style_grams(style_representation)
        content_c4 = content_representation['conv4_1']

        total = None
        for name, feat in input_representation.items():
            c = int(feat.shape[0])
            channels_last = self._channels_last(c)
            x_flat = self._flatten_one(feat)
            content_flat = (self._flatten_one(content_c4)
                            if name == 'conv4_1' else None)
            term = layer_loss(ab, x_flat, style_grams[name], content_flat,
                              channels_last=channels_last,
                              spatial_tile=self.spatial_tile)
            total = term if total is None else total + term
        return total

    __call__ = forward


# --------------------- pure-JAX reference (sanity check) ---------------------

def _reference_loss(alpha, beta, inp, cont, sty):
    hp = lax.Precision.HIGHEST
    loss = alpha * jnp.mean((inp['conv4_1'] - cont['conv4_1']) ** 2)
    for k in inp:
        x = inp[k].reshape(inp[k].shape[0], -1)
        s = sty[k].reshape(sty[k].shape[0], -1)
        gx = jnp.matmul(x, x.T, precision=hp)
        gs = jnp.matmul(s, s.T, precision=hp)
        c = gx.shape[0]
        loss = loss + beta * jnp.mean((gx - gs) ** 2) / c ** 2 / c ** 2
    return loss


if __name__ == "__main__":
    key = jax.random.PRNGKey(0)

    # Small VGG-like feature pyramid (C, H, W) per layer.  Shapes chosen so the
    # forced-tiling run below exercises multi-tile + ragged paths in both the
    # channels-first (small C) and channels-last (C >= 128) layouts, and the
    # content layer with its fused MSE accumulation.
    layer_shapes = {
        'conv1_1': (4, 18, 18),      # M=324  -> 3 ragged tiles at tile=128
        'conv2_1': (8, 16, 16),      # M=256  -> 2 exact tiles at tile=128
        'conv3_1': (128, 12, 12),    # C>=128 -> channels-last path, ragged
        'conv4_1': (16, 12, 12),     # content layer, ragged at tile=128
    }

    def make_rep(k):
        rep = {}
        for name, shape in layer_shapes.items():
            k, sub = jax.random.split(k)
            rep[name] = jax.random.normal(sub, shape, dtype=jnp.float32)
        return k, rep

    key, input_rep = make_rep(key)
    key, content_rep = make_rep(key)
    key, style_rep = make_rep(key)

    alpha, beta = 1.0, 1e3
    ref = _reference_loss(alpha, beta, input_rep, content_rep, style_rep)

    # 1) Default: adaptive tiles (single full block per layer at these sizes).
    loss_fn = StyleTransferLoss(alpha, beta)
    loss = loss_fn(input_rep, content_rep, style_rep)
    jax.block_until_ready(loss)
    assert jnp.allclose(loss, ref, rtol=1e-4, atol=1e-3), (loss, ref)

    # 2) Second call: style grams served from the cache (only streamed layer
    #    kernels run), result unchanged.
    loss2 = loss_fn(input_rep, content_rep, style_rep)
    jax.block_until_ready(loss2)
    assert jnp.allclose(loss2, ref, rtol=1e-4, atol=1e-3), (loss2, ref)

    # 3) Force multi-tile streaming (ragged last tile, content layer, both
    #    layouts) by shrinking the spatial tile.
    loss_tiled = StyleTransferLoss(alpha, beta, spatial_tile=128)(
        input_rep, content_rep, style_rep)
    jax.block_until_ready(loss_tiled)
    assert jnp.allclose(loss_tiled, ref, rtol=1e-4, atol=1e-3), (loss_tiled, ref)

    # 4) bfloat16 feature streaming (halves HBM traffic; f32 MXU accumulation).
    loss_bf16 = StyleTransferLoss(alpha, beta, compute_dtype=jnp.bfloat16)(
        input_rep, content_rep, style_rep)
    jax.block_until_ready(loss_bf16)
    assert bool(jnp.isfinite(loss_bf16))
    assert jnp.allclose(loss_bf16, ref, rtol=1e-1), (loss_bf16, ref)

    # 5) Standalone tiled gram (style precompute path): ragged tiles, both layouts.
    key, sub = jax.random.split(key)
    big_cf = jax.random.normal(sub, (8, 1300), dtype=jnp.float32)     # (C, M)
    g_cf = gram_matrix(big_cf, channels_last=False, spatial_tile=512)  # 3 tiles, ragged
    jax.block_until_ready(g_cf)
    g_cf_ref = jnp.matmul(big_cf, big_cf.T, precision=lax.Precision.HIGHEST)
    assert jnp.allclose(g_cf, g_cf_ref, rtol=1e-4, atol=1e-3), (g_cf, g_cf_ref)

    key, sub = jax.random.split(key)
    big_cl = jax.random.normal(sub, (600, 128), dtype=jnp.float32)    # (M, C)
    g_cl = gram_matrix(big_cl, channels_last=True, spatial_tile=256)   # 3 tiles, ragged
    jax.block_until_ready(g_cl)
    g_cl_ref = jnp.matmul(big_cl.T, big_cl, precision=lax.Precision.HIGHEST)
    assert jnp.allclose(g_cl, g_cl_ref, rtol=1e-4, atol=1e-3), (g_cl, g_cl_ref)

    print("KERNEL_OK")
</pallas_src>

<mosaic_0001>
module attributes {stable_mosaic.version = 11 : i64} {
  func.func @kernel(%arg0: i32, %arg1: memref<4x324xf32, #tpu.memory_space<vmem>>, %arg2: memref<4x4xf32, #tpu.memory_space<vmem>>) attributes {dimension_semantics = [#tpu.dimension_semantics<arbitrary>], iteration_bounds = array<i64: 1>, scalar_prefetch = 0 : i64, scratch_operands = 0 : i64, tpu.core_type = #tpu.core_type<tc>, window_params = [{transform_indices = @transform_0, window_bounds = array<i64: 4, 324>}, {pipeline_mode = #tpu.pipeline_mode<synchronous>, transform_indices = @transform_1, window_bounds = array<i64: 4, 4>}]} {
    %c0_i32 = arith.constant 0 : i32
    %0 = arith.cmpi eq, %arg0, %c0_i32 : i32
    %1 = arith.extui %0 : i1 to i32
    %c0_i32_0 = arith.constant 0 : i32
    %2 = arith.cmpi ne, %1, %c0_i32_0 : i32
    scf.if %2 {
      %cst_6 = arith.constant 0.000000e+00 : f32
      %8 = vector.broadcast %cst_6 : f32 to vector<4x4xf32>
      %c0_7 = arith.constant 0 : index
      %c0_8 = arith.constant 0 : index
      %9 = vector.load %arg2[%c0_7, %c0_8] : memref<4x4xf32, #tpu.memory_space<vmem>>, vector<4x4xf32>
      tpu.vector_store %arg2[%c0_7, %c0_8], %8 {strides = array<i32>} : memref<4x4xf32, #tpu.memory_space<vmem>>, vector<4x4xf32>,
    } else {
    }
    %c0 = arith.constant 0 : index
    %c0_1 = arith.constant 0 : index
    %3 = vector.load %arg1[%c0, %c0_1] : memref<4x324xf32, #tpu.memory_space<vmem>>, vector<4x324xf32>
    %c0_2 = arith.constant 0 : index
    %c0_3 = arith.constant 0 : index
    %4 = vector.load %arg2[%c0_2, %c0_3] : memref<4x4xf32, #tpu.memory_space<vmem>>, vector<4x4xf32>
    %cst = arith.constant dense<0.000000e+00> : vector<4x4xf32>
    %5 = tpu.matmul %3, %3, %cst {dimension_numbers = #tpu.dot_dimension_numbers<[1], [1], [0], [0], [0, 0, 1, 0], [], []>} : vector<4x324xf32>, vector<4x324xf32>, vector<4x4xf32> -> vector<4x4xf32>
    %6 = arith.addf %4, %5 : vector<4x4xf32>
    %c0_4 = arith.constant 0 : index
    %c0_5 = arith.constant 0 : index
    %7 = vector.load %arg2[%c0_4, %c0_5] : memref<4x4xf32, #tpu.memory_space<vmem>>, vector<4x4xf32>
    tpu.vector_store %arg2[%c0_4, %c0_5], %6 {strides = array<i32>} : memref<4x4xf32, #tpu.memory_space<vmem>>, vector<4x4xf32>,
    return
  }
  func.func @transform_0(%arg0: i32) -> (i32, i32) {
    %c0_i32 = arith.constant 0 : i32
    %c0_i32_0 = arith.constant 0 : i32
    return %c0_i32, %arg0 : i32, i32
  }
  func.func @transform_1(%arg0: i32) -> (i32, i32) {
    %c0_i32 = arith.constant 0 : i32
    %c0_i32_0 = arith.constant 0 : i32
    %c0_i32_1 = arith.constant 0 : i32
    return %c0_i32, %c0_i32_0 : i32, i32
  }
}

</mosaic_0001>

<llo_original>
// kernel: tpu_custom_call.1
$region0: #{tpu_custom_call.1}
  #allocation0 [shape = 'u32[]', space=smem, size = 0x4, offset = 0x4, fixed_abs, tag = 'smem constant byte address 0x4 - core index']
  #allocation1 [shape = 'u32[144,128]{1,0:T(1,128)}', space=vmem, size = 0x12000, scoped, tag = 'internal scratch']
  %s0 = inlined_call_operand.hbm [shape: f32[4,324], index: 0, kind: input, shape index: {}]
  %s1 = inlined_call_operand.hbm [shape: f32[4,4], index: 1, kind: output, shape index: {}]
  %s2 = sld [smem:[#allocation0]]
  $region22: #{tpu_custom_call.1} parent=0
    _
  %s4 = ssub.s32 1, %s2
  %s5 = scalar_select 0, %s4, %s2
  $region1: #{tpu_custom_call.1} parent=0
    #allocation2 [shape = 'u8[6144]{0}', space=vmem, size = 0x1800, scoped, tag = 'input window, operand 0, single buffered']
    #allocation3 [shape = 's32[1]{0}', space=sflag, size = 0x4, scoped, tag = 'scoped memory for tpu_custom_call.1']
    #allocation4 [shape = 's32[1]{0}', space=sflag, size = 0x4, scoped, tag = 'scoped memory for tpu_custom_call.1']
    #allocation5 [shape = 'u8[2048]{0}', space=vmem, size = 0x800, scoped, tag = 'output window, operand 0, single buffered']
    %6 = vsyncpa [#allocation3], 0
    %7 = vsyncpa [#allocation4], 0
    // Predicated region
    $region2: #{tpu_custom_call.1} parent=1 // pred_check
      _
    $region3: #{tpu_custom_call.1} parent=1 // pred_check_branch
      %9 = sbr.rel (0) target = $region5
    $region4: #{tpu_custom_call.1} parent=1 // pred_region
      %s11 = ssub.s32 192, 192
      %12 = vsyncadd [#allocation3], %s11
      %s14 = sshll.u32 [#allocation2], 4
      %s15 = int_to_ptr.vmem [resolvable:$true] %s14
      %17 = dma.hbm_to_vmem [thread:$0]  %s0, 192, %s15, [#allocation3]
    $region5: #{tpu_custom_call.1} parent=1 // pred_fallthru
      _
    // Predicated region
    $region6: #{tpu_custom_call.1} parent=1 // pred_check
      _
    $region7: #{tpu_custom_call.1} parent=1 // pred_check_branch
      %19 = sbr.rel (0) target = $region9
    $region8: #{tpu_custom_call.1} parent=1 // pred_region
      %20 = dma.done [#allocation3], 192
    $region9: #{tpu_custom_call.1} parent=1 // pred_fallthru
      _
    %p21 = scmp.eq.s32.totalorder 0, 0
    // Predicated region
    $region10: #{tpu_custom_call.1} parent=1 // pred_check
      %p22 = pneg %p21
    $region11: #{tpu_custom_call.1} parent=1 // pred_check_branch
      %24 = sbr.rel (%p22) target = $region13
    $region12: #{tpu_custom_call.1} parent=1 // pred_region
      %vm25 = vcmask 27648
      %26 = vst.msk [vmem:[#allocation5] sm:$0xf] %vm25, 0.0
    $region13: #{tpu_custom_call.1} parent=1 // pred_fallthru
      _
    %v27 = vld [vmem:[#allocation2] sm:$0xff]
    %v28 = vld [vmem:[#allocation2 + $0x8] sm:$0xf]
    %v29 = vld [vmem:[#allocation5] sm:$0xf]
    %v32 = vcombine.high %v27, %v27
    %vm34 = vcmask 556032
    %v35 = vsel %vm34, %v28, 0
    %37 = vmatprep.subr.mxu0 %v32
    %38 = vmatpush1.xpose.msra.mxu0 %v27
    %39 = vmatprep.subr.mxu0 0.0
    %40 = vmatpush1.xpose.msra.mxu0 0.0
    %41 = vmatprep.subr.mxu0 0.0
    %42 = vmatpush1.xpose.msra.mxu0 0.0
    %43 = vmatprep.subr.mxu0 0.0
    %44 = vmatpush1.xpose.msra.mxu0 0.0
    %45 = vmatprep.subr.mxu0 0.0
    %46 = vmatpush1.xpose.msra.mxu0 0.0
    %47 = vmatprep.subr.mxu0 0.0
    %48 = vmatpush1.xpose.msra.mxu0 0.0
    %49 = vmatprep.subr.mxu0 0.0
    %50 = vmatpush1.xpose.msra.mxu0 0.0
    %51 = vmatprep.subr.mxu0 0.0
    %52 = vmatpush1.xpose.msra.mxu0 0.0
    %53 = vmatprep.subr.mxu0 0.0
    %54 = vmatpush1.xpose.msra.mxu0 0.0
    %55 = vmatprep.subr.mxu0 0.0
    %56 = vmatpush1.xpose.msra.mxu0 0.0
    %57 = vmatprep.subr.mxu0 0.0
    %58 = vmatpush1.xpose.msra.mxu0 0.0
    %59 = vmatprep.subr.mxu0 0.0
    %60 = vmatpush1.xpose.msra.mxu0 0.0
    %61 = vmatprep.subr.mxu0 0.0
    %62 = vmatpush1.xpose.msra.mxu0 0.0
    %63 = vmatprep.subr.mxu0 0.0
    %64 = vmatpush1.xpose.msra.mxu0 0.0
    %65 = vmatprep.subr.mxu0 0.0
    %66 = vmatpush1.xpose.msra.mxu0 0.0
    %67 = vmatprep.subr.mxu0 0.0
    %68 = vmatpush1.xpose.msra.mxu0 0.0
    %69 = vmatprep.subr.mxu0 0.0
    %70 = vmatpush1.xpose.msra.mxu0 0.0
    %71 = vmatprep.subr.mxu0 0.0
    %72 = vmatpush1.xpose.msra.mxu0 0.0
    %73 = vmatprep.subr.mxu0 0.0
    %74 = vmatpush1.xpose.msra.mxu0 0.0
    %75 = vmatprep.subr.mxu0 0.0
    %76 = vmatpush1.xpose.msra.mxu0 0.0
    %77 = vmatprep.subr.mxu0 0.0
    %78 = vmatpush1.xpose.msra.mxu0 0.0
    %79 = vmatprep.subr.mxu0 0.0
    %80 = vmatpush1.xpose.msra.mxu0 0.0
    %81 = vmatprep.subr.mxu0 0.0
    %82 = vmatpush1.xpose.msra.mxu0 0.0
    %83 = vmatprep.subr.mxu0 0.0
    %84 = vmatpush1.xpose.msra.mxu0 0.0
    %85 = vmatprep.subr.mxu0 0.0
    %86 = vmatpush1.xpose.msra.mxu0 0.0
    %87 = vmatprep.subr.mxu0 0.0
    %88 = vmatpush1.xpose.msra.mxu0 0.0
    %89 = vmatprep.subr.mxu0 0.0
    %90 = vmatpush1.xpose.msra.mxu0 0.0
    %91 = vmatprep.subr.mxu0 0.0
    %92 = vmatpush1.xpose.msra.mxu0 0.0
    %93 = vmatprep.subr.mxu0 0.0
    %94 = vmatpush1.xpose.msra.mxu0 0.0
    %95 = vmatprep.subr.mxu0 0.0
    %96 = vmatpush1.xpose.msra.mxu0 0.0
    %97 = vmatprep.subr.mxu0 0.0
    %98 = vmatpush1.xpose.msra.mxu0 0.0
    %99 = vmatprep.subr.mxu0 0.0
    %100 = vmatpush1.xpose.msra.mxu0 0.0
    %101 = vmatprep.mubr.f32.mxu0 %v32
    %102 = vmatmul.mubr.f32.gmra.mrb[0].mxu0 %v27
    %v103 = vpop.f32.mrb[0].mxu0
    %v104 = vadd.f32 0.0, %v103
    %v105 = vpop.f32.mrb[0].mxu0
    %106 = vdwg.mxu0
    %107 = vmatprep.subr.mxu0 0.0
    %108 = vmatpush1.xpose.msra.mxu0 %v35
    %109 = vmatprep.subr.mxu0 0.0
    %110 = vmatpush1.xpose.msra.mxu0 0.0
    %111 = vmatprep.subr.mxu0 0.0
    %112 = vmatpush1.xpose.msra.mxu0 0.0
    %113 = vmatprep.subr.mxu0 0.0
    %114 = vmatpush1.xpose.msra.mxu0 0.0
    %115 = vmatprep.subr.mxu0 0.0
    %116 = vmatpush1.xpose.msra.mxu0 0.0
    %117 = vmatprep.subr.mxu0 0.0
    %118 = vmatpush1.xpose.msra.mxu0 0.0
    %119 = vmatprep.subr.mxu0 0.0
    %120 = vmatpush1.xpose.msra.mxu0 0.0
    %121 = vmatprep.subr.mxu0 0.0
    %122 = vmatpush1.xpose.msra.mxu0 0.0
    %123 = vmatprep.subr.mxu0 0.0
    %124 = vmatpush1.xpose.msra.mxu0 0.0
    %125 = vmatprep.subr.mxu0 0.0
    %126 = vmatpush1.xpose.msra.mxu0 0.0
    %127 = vmatprep.subr.mxu0 0.0
    %128 = vmatpush1.xpose.msra.mxu0 0.0
    %129 = vmatprep.subr.mxu0 0.0
    %130 = vmatpush1.xpose.msra.mxu0 0.0
    %131 = vmatprep.subr.mxu0 0.0
    %132 = vmatpush1.xpose.msra.mxu0 0.0
    %133 = vmatprep.subr.mxu0 0.0
    %134 = vmatpush1.xpose.msra.mxu0 0.0
    %135 = vmatprep.subr.mxu0 0.0
    %136 = vmatpush1.xpose.msra.mxu0 0.0
    %137 = vmatprep.subr.mxu0 0.0
    %138 = vmatpush1.xpose.msra.mxu0 0.0
    %139 = vmatprep.subr.mxu0 0.0
    %140 = vmatpush1.xpose.msra.mxu0 0.0
    %141 = vmatprep.subr.mxu0 0.0
    %142 = vmatpush1.xpose.msra.mxu0 0.0
    %143 = vmatprep.subr.mxu0 0.0
    %144 = vmatpush1.xpose.msra.mxu0 0.0
    %145 = vmatprep.subr.mxu0 0.0
    %146 = vmatpush1.xpose.msra.mxu0 0.0
    %147 = vmatprep.subr.mxu0 0.0
    %148 = vmatpush1.xpose.msra.mxu0 0.0
    %149 = vmatprep.subr.mxu0 0.0
    %150 = vmatpush1.xpose.msra.mxu0 0.0
    %151 = vmatprep.subr.mxu0 0.0
    %152 = vmatpush1.xpose.msra.mxu0 0.0
    %153 = vmatprep.subr.mxu0 0.0
    %154 = vmatpush1.xpose.msra.mxu0 0.0
    %155 = vmatprep.subr.mxu0 0.0
    %156 = vmatpush1.xpose.msra.mxu0 0.0
    %157 = vmatprep.subr.mxu0 0.0
    %158 = vmatpush1.xpose.msra.mxu0 0.0
    %159 = vmatprep.subr.mxu0 0.0
    %160 = vmatpush1.xpose.msra.mxu0 0.0
    %161 = vmatprep.subr.mxu0 0.0
    %162 = vmatpush1.xpose.msra.mxu0 0.0
    %163 = vmatprep.subr.mxu0 0.0
    %164 = vmatpush1.xpose.msra.mxu0 0.0
    %165 = vmatprep.subr.mxu0 0.0
    %166 = vmatpush1.xpose.msra.mxu0 0.0
    %167 = vmatprep.subr.mxu0 0.0
    %168 = vmatpush1.xpose.msra.mxu0 0.0
    %169 = vmatprep.subr.mxu0 0.0
    %170 = vmatpush1.xpose.msra.mxu0 0.0
    %171 = vmatprep.mubr.f32.mxu0 0.0
    %172 = vmatmul.mubr.f32.gmra.mrb[0].mxu0 %v35
    %v173 = vpop.f32.mrb[0].mxu0
    %v174 = vadd.f32 %v104, %v173
    %v175 = vpop.f32.mrb[0].mxu0
    %176 = vdwg.mxu0
    %v177 = vadd.f32 %v29, %v174
    %vm178 = vcmask 27648
    %179 = vst.msk [vmem:[#allocation5] sm:$0xf] %vm178, %v177
    // Predicated region
    $region14: #{tpu_custom_call.1} parent=1 // pred_check
      _
    $region15: #{tpu_custom_call.1} parent=1 // pred_check_branch
      %181 = sbr.rel (0) target = $region17
    $region16: #{tpu_custom_call.1} parent=1 // pred_region
      %s183 = ssub.s32 64, 64
      %184 = vsyncadd [#allocation4], %s183
      %s186 = sshll.u32 [#allocation5], 4
      %s187 = int_to_ptr.vmem [resolvable:$true] %s186
      %189 = dma.vmem_to_hbm [thread:$0]  %s187, 64, %s1, [#allocation4]
    $region17: #{tpu_custom_call.1} parent=1 // pred_fallthru
      _
    // Predicated region
    $region18: #{tpu_custom_call.1} parent=1 // pred_check
      _
    $region19: #{tpu_custom_call.1} parent=1 // pred_check_branch
      %191 = sbr.rel (0) target = $region21
    $region20: #{tpu_custom_call.1} parent=1 // pred_region
      %192 = dma.done [#allocation4], 64
    $region21: #{tpu_custom_call.1} parent=1 // pred_fallthru
      _
    %193 = vsyncpa [#allocation3], 1
    %194 = vsyncpa [#allocation4], 1

</llo_original>
